<compile_context>
chip_gen: v7x
topology: tpu7x:2x2x1
jax: 0.10.0
libtpu: 0.0.40
codegen_flags: <defaults>
</compile_context>

<pallas_src>
import jax
import jax.numpy as jnp
from jax.experimental import pallas as pl
from jax.experimental.pallas import tpu as pltpu


def option_policy_kernel(x_ref, w1_ref, b1_ref, w2_ref, b2_ref,
                         w3_ref, b3_ref, o_ref):
    """One (TILE_B, state_dim) batch tile through the whole MLP + softmax."""
    x = x_ref[...]                     # already in the MXU dtype (wrapper cast)

    # Layer 1: Linear + ReLU  (Dropout = identity in eval mode)
    h1 = jnp.dot(x, w1_ref[...],
                 preferred_element_type=jnp.float32) + b1_ref[...]
    h1 = jnp.maximum(h1, 0.0)

    # Layer 2: Linear + ReLU
    h2 = jnp.dot(h1.astype(w2_ref.dtype), w2_ref[...],
                 preferred_element_type=jnp.float32) + b2_ref[...]
    h2 = jnp.maximum(h2, 0.0)

    # Output layer: Linear.  Action dim is padded to a full 128-lane slab for
    # the matmul/softmax; padded lanes carry f32 bias -1e30 so exp() -> 0.
    logits = jnp.dot(h2.astype(w3_ref.dtype), w3_ref[...],
                     preferred_element_type=jnp.float32) + b3_ref[...]

    # Numerically-stable softmax along the (lane) action axis.  Padded lanes
    # contribute exactly 0 to the denominator.  Exact divide -> rows sum to 1.
    m = jnp.max(logits, axis=-1, keepdims=True)
    e = jnp.exp(logits - m)
    denom = jnp.sum(e, axis=-1, keepdims=True)

    # Store only the real action lanes (narrow store; kernel is DMA-bound, so
    # the masked vst is cheap and HBM writeback shrinks ~30x vs padded f32).
    a = o_ref.shape[-1]
    o_ref[...] = (e[:, :a] / denom).astype(o_ref.dtype)


def _round_up(n, m):
    return ((n + m - 1) // m) * m


def option_policy_forward(x, params, *, tile_b=2048, matmul_dtype=jnp.bfloat16):
    """Batched eval-mode forward of OptionPolicy.

    Tiles the batch with a large tile (default 2048) to amortize per-grid-step
    overhead, keeps all weights VMEM-resident, and guarantees >= 2 tiles for
    medium/large batches so v7x's two TensorCores both get work.
    """
    w1, b1, w2, b2, w3, b3 = params
    B, S = x.shape
    H1 = w1.shape[1]
    H2 = w2.shape[1]
    A = w3.shape[1]

    LANE = 128
    NEG = jnp.float32(-1e30)

    # Lane-pad the action dim for the in-kernel matmul/softmax only.
    A_pad = _round_up(max(A, LANE), LANE)
    w3p = jnp.zeros((H2, A_pad), jnp.float32).at[:, :A].set(w3)
    # b3p MUST stay f32: -1e30 cast to bf16 becomes -inf -> NaN risk in exp().
    b3p = jnp.full((1, A_pad), NEG, dtype=jnp.float32).at[:, :A].set(b3)

    # Batch tiling: large tiles, but at least 2 tiles once B >= 16 rows so the
    # "parallel" batch axis can shard across both v7x TensorCores.
    tile_b = _round_up(max(tile_b, 8), 8)
    B8 = _round_up(B, 8)
    if B8 >= 16:
        tile = min(tile_b, _round_up(pl.cdiv(B8, 2), 8))
    else:
        tile = B8
    n_tiles = pl.cdiv(B, tile)
    B_pad = n_tiles * tile

    # Cast activations to the MXU dtype in the wrapper (halves input DMA).
    x_p = x.astype(matmul_dtype)
    if B_pad != B:
        x_p = jnp.zeros((B_pad, S), matmul_dtype).at[:B, :].set(x_p)

    # Weights fed to the MXU in bf16 (f32 accumulation via preferred_element_type).
    w1c = w1.astype(matmul_dtype)
    w2c = w2.astype(matmul_dtype)
    w3c = w3p.astype(matmul_dtype)

    def resident(shape):
        # Same block every grid step -> stays VMEM-resident across the grid.
        return pl.BlockSpec(shape, lambda i: (0, 0))

    compiler_kwargs = dict(dimension_semantics=("parallel",))  # v7x: split batch tiles
    if tile >= 8192:
        # Only needed for very large batch tiles; default scoped VMEM is ample
        # at tile<=4096 (intermediates are a few MB).
        compiler_kwargs["vmem_limit_bytes"] = 64 * 1024 * 1024

    out = pl.pallas_call(
        option_policy_kernel,
        out_shape=jax.ShapeDtypeStruct((B_pad, A), jnp.float32),  # unpadded A
        grid=(n_tiles,),
        in_specs=[
            pl.BlockSpec((tile, S), lambda i: (i, 0)),    # x: tiled over batch
            resident((S, H1)), resident((1, H1)),         # layer 1
            resident((H1, H2)), resident((1, H2)),        # layer 2
            resident((H2, A_pad)), resident((1, A_pad)),  # output layer (padded)
        ],
        out_specs=pl.BlockSpec((tile, A), lambda i: (i, 0)),
        compiler_params=pltpu.CompilerParams(**compiler_kwargs),
    )(x_p, w1c, b1, w2c, b2, w3c, b3p)

    return out[:B]


def init_params(key, state_dim, action_dim, hidden_dims):
    """Deterministic PyTorch-style (uniform +/- 1/sqrt(fan_in)) initialization."""
    params = []
    dims = [state_dim] + list(hidden_dims) + [action_dim]
    for i in range(len(dims) - 1):
        fan_in, fan_out = dims[i], dims[i + 1]
        key, kw, kb = jax.random.split(key, 3)
        bound = 1.0 / (fan_in ** 0.5)
        w = jax.random.uniform(kw, (fan_in, fan_out), jnp.float32, -bound, bound)
        b = jax.random.uniform(kb, (1, fan_out), jnp.float32, -bound, bound)
        params += [w, b]
    return tuple(params)


def reference_forward(x, params):
    """Pure-JAX f32 reference (eval-mode forward of the PyTorch module)."""
    w1, b1, w2, b2, w3, b3 = params
    h = jnp.maximum(x @ w1 + b1, 0.0)
    h = jnp.maximum(h @ w2 + b2, 0.0)
    return jax.nn.softmax(h @ w3 + b3, axis=-1)


if __name__ == "__main__":
    state_dim = 8
    action_dim = 4
    hidden_dims = [64, 64]

    key = jax.random.PRNGKey(0)
    key, kx, kx2 = jax.random.split(key, 3)
    params = init_params(key, state_dim, action_dim, hidden_dims)

    fwd = jax.jit(option_policy_forward)

    # Small batch (single 8-row tile).
    x = jax.random.normal(kx, (4, state_dim), dtype=jnp.float32)
    probs = jax.block_until_ready(fwd(x, params))
    ref = reference_forward(x, params)
    assert probs.shape == (4, action_dim)
    assert jnp.allclose(jnp.sum(probs, axis=-1), 1.0, atol=1e-5)
    assert jnp.allclose(probs, ref, atol=3e-2)

    # Larger batch: exercises multiple grid tiles + batch padding path.
    xl = jax.random.normal(kx2, (300, state_dim), dtype=jnp.float32)
    probs_l = jax.block_until_ready(fwd(xl, params))
    ref_l = reference_forward(xl, params)
    assert probs_l.shape == (300, action_dim)
    assert jnp.allclose(jnp.sum(probs_l, axis=-1), 1.0, atol=1e-5)
    assert jnp.allclose(probs_l, ref_l, atol=4e-2)

    print("KERNEL_OK")
</pallas_src>

<mosaic_0001>
module attributes {stable_mosaic.version = 11 : i64} {
  func.func @option_policy_kernel(%arg0: i32, %arg1: memref<8x8xbf16, #tpu.memory_space<vmem>>, %arg2: memref<8x64xbf16, #tpu.memory_space<vmem>>, %arg3: memref<1x64xf32, #tpu.memory_space<vmem>>, %arg4: memref<64x64xbf16, #tpu.memory_space<vmem>>, %arg5: memref<1x64xf32, #tpu.memory_space<vmem>>, %arg6: memref<64x128xbf16, #tpu.memory_space<vmem>>, %arg7: memref<1x128xf32, #tpu.memory_space<vmem>>, %arg8: memref<8x4xf32, #tpu.memory_space<vmem>>) attributes {dimension_semantics = [#tpu.dimension_semantics<parallel>], iteration_bounds = array<i64: 1>, scalar_prefetch = 0 : i64, scratch_operands = 0 : i64, tpu.core_type = #tpu.core_type<tc>, window_params = [{transform_indices = @transform_0, window_bounds = array<i64: 8, 8>}, {pipeline_mode = #tpu.pipeline_mode<synchronous>, transform_indices = @transform_1, window_bounds = array<i64: 8, 64>}, {pipeline_mode = #tpu.pipeline_mode<synchronous>, transform_indices = @transform_2, window_bounds = array<i64: 1, 64>}, {pipeline_mode = #tpu.pipeline_mode<synchronous>, transform_indices = @transform_3, window_bounds = array<i64: 64, 64>}, {pipeline_mode = #tpu.pipeline_mode<synchronous>, transform_indices = @transform_4, window_bounds = array<i64: 1, 64>}, {pipeline_mode = #tpu.pipeline_mode<synchronous>, transform_indices = @transform_5, window_bounds = array<i64: 64, 128>}, {pipeline_mode = #tpu.pipeline_mode<synchronous>, transform_indices = @transform_6, window_bounds = array<i64: 1, 128>}, {transform_indices = @transform_7, window_bounds = array<i64: 8, 4>}]} {
    %c0 = arith.constant 0 : index
    %c0_0 = arith.constant 0 : index
    %0 = vector.load %arg1[%c0, %c0_0] : memref<8x8xbf16, #tpu.memory_space<vmem>>, vector<8x8xbf16>
    %c0_1 = arith.constant 0 : index
    %c0_2 = arith.constant 0 : index
    %1 = vector.load %arg2[%c0_1, %c0_2] : memref<8x64xbf16, #tpu.memory_space<vmem>>, vector<8x64xbf16>
    %cst = arith.constant dense<0.000000e+00> : vector<8x64xf32>
    %2 = tpu.matmul %0, %1, %cst {dimension_numbers = #tpu.dot_dimension_numbers<[1], [0], [0], [1], [0, 0, 1, 1], [], []>} : vector<8x8xbf16>, vector<8x64xbf16>, vector<8x64xf32> -> vector<8x64xf32>
    %c0_3 = arith.constant 0 : index
    %c0_4 = arith.constant 0 : index
    %3 = vector.load %arg3[%c0_3, %c0_4] : memref<1x64xf32, #tpu.memory_space<vmem>>, vector<1x64xf32>
    %4 = vector.broadcast %3 : vector<1x64xf32> to vector<8x64xf32>
    %5 = arith.addf %2, %4 : vector<8x64xf32>
    %cst_5 = arith.constant 0.000000e+00 : f32
    %6 = vector.broadcast %cst_5 : f32 to vector<8x64xf32>
    %7 = arith.maximumf %5, %6 : vector<8x64xf32>
    %8 = arith.truncf %7 : vector<8x64xf32> to vector<8x64xbf16>
    %c0_6 = arith.constant 0 : index
    %c0_7 = arith.constant 0 : index
    %9 = vector.load %arg4[%c0_6, %c0_7] : memref<64x64xbf16, #tpu.memory_space<vmem>>, vector<64x64xbf16>
    %cst_8 = arith.constant dense<0.000000e+00> : vector<8x64xf32>
    %10 = tpu.matmul %8, %9, %cst_8 {dimension_numbers = #tpu.dot_dimension_numbers<[1], [0], [0], [1], [0, 0, 1, 1], [], []>} : vector<8x64xbf16>, vector<64x64xbf16>, vector<8x64xf32> -> vector<8x64xf32>
    %c0_9 = arith.constant 0 : index
    %c0_10 = arith.constant 0 : index
    %11 = vector.load %arg5[%c0_9, %c0_10] : memref<1x64xf32, #tpu.memory_space<vmem>>, vector<1x64xf32>
    %12 = vector.broadcast %11 : vector<1x64xf32> to vector<8x64xf32>
    %13 = arith.addf %10, %12 : vector<8x64xf32>
    %cst_11 = arith.constant 0.000000e+00 : f32
    %14 = vector.broadcast %cst_11 : f32 to vector<8x64xf32>
    %15 = arith.maximumf %13, %14 : vector<8x64xf32>
    %16 = arith.truncf %15 : vector<8x64xf32> to vector<8x64xbf16>
    %c0_12 = arith.constant 0 : index
    %c0_13 = arith.constant 0 : index
    %17 = vector.load %arg6[%c0_12, %c0_13] : memref<64x128xbf16, #tpu.memory_space<vmem>>, vector<64x128xbf16>
    %cst_14 = arith.constant dense<0.000000e+00> : vector<8x128xf32>
    %18 = tpu.matmul %16, %17, %cst_14 {dimension_numbers = #tpu.dot_dimension_numbers<[1], [0], [0], [1], [0, 0, 1, 1], [], []>} : vector<8x64xbf16>, vector<64x128xbf16>, vector<8x128xf32> -> vector<8x128xf32>
    %c0_15 = arith.constant 0 : index
    %c0_16 = arith.constant 0 : index
    %19 = vector.load %arg7[%c0_15, %c0_16] : memref<1x128xf32, #tpu.memory_space<vmem>>, vector<1x128xf32>
    %20 = vector.broadcast %19 : vector<1x128xf32> to vector<8x128xf32>
    %21 = arith.addf %18, %20 : vector<8x128xf32>
    %cst_17 = arith.constant dense<0xFF800000> : vector<8xf32>
    %22 = vector.multi_reduction <maximumf>, %21, %cst_17 [1] : vector<8x128xf32> to vector<8xf32>
    %23 = vector.shape_cast %22 : vector<8xf32> to vector<8x1xf32>
    %24 = vector.broadcast %23 : vector<8x1xf32> to vector<8x128xf32>
    %25 = arith.subf %21, %24 : vector<8x128xf32>
    %26 = math.exp %25 : vector<8x128xf32>
    %cst_18 = arith.constant dense<0.000000e+00> : vector<8xf32>
    %27 = vector.multi_reduction <add>, %26, %cst_18 [1] : vector<8x128xf32> to vector<8xf32>
    %28 = vector.shape_cast %27 : vector<8xf32> to vector<8x1xf32>
    %29 = vector.extract_strided_slice %26 {offsets = [0, 0], sizes = [8, 4], strides = [1, 1]} : vector<8x128xf32> to vector<8x4xf32>
    %30 = vector.broadcast %28 : vector<8x1xf32> to vector<8x4xf32>
    %31 = arith.divf %29, %30 : vector<8x4xf32>
    %c0_19 = arith.constant 0 : index
    %c0_20 = arith.constant 0 : index
    %32 = vector.load %arg8[%c0_19, %c0_20] : memref<8x4xf32, #tpu.memory_space<vmem>>, vector<8x4xf32>
    tpu.vector_store %arg8[%c0_19, %c0_20], %31 {strides = array<i32>} : memref<8x4xf32, #tpu.memory_space<vmem>>, vector<8x4xf32>,
    return
  }
  func.func @transform_0(%arg0: i32) -> (i32, i32) {
    %c0_i32 = arith.constant 0 : i32
    %c0_i32_0 = arith.constant 0 : i32
    return %arg0, %c0_i32 : i32, i32
  }
  func.func @transform_1(%arg0: i32) -> (i32, i32) {
    %c0_i32 = arith.constant 0 : i32
    %c0_i32_0 = arith.constant 0 : i32
    %c0_i32_1 = arith.constant 0 : i32
    return %c0_i32, %c0_i32_0 : i32, i32
  }
  func.func @transform_2(%arg0: i32) -> (i32, i32) {
    %c0_i32 = arith.constant 0 : i32
    %c0_i32_0 = arith.constant 0 : i32
    %c0_i32_1 = arith.constant 0 : i32
    return %c0_i32, %c0_i32_0 : i32, i32
  }
  func.func @transform_3(%arg0: i32) -> (i32, i32) {
    %c0_i32 = arith.constant 0 : i32
    %c0_i32_0 = arith.constant 0 : i32
    %c0_i32_1 = arith.constant 0 : i32
    return %c0_i32, %c0_i32_0 : i32, i32
  }
  func.func @transform_4(%arg0: i32) -> (i32, i32) {
    %c0_i32 = arith.constant 0 : i32
    %c0_i32_0 = arith.constant 0 : i32
    %c0_i32_1 = arith.constant 0 : i32
    return %c0_i32, %c0_i32_0 : i32, i32
  }
  func.func @transform_5(%arg0: i32) -> (i32, i32) {
    %c0_i32 = arith.constant 0 : i32
    %c0_i32_0 = arith.constant 0 : i32
    %c0_i32_1 = arith.constant 0 : i32
    return %c0_i32, %c0_i32_0 : i32, i32
  }
  func.func @transform_6(%arg0: i32) -> (i32, i32) {
    %c0_i32 = arith.constant 0 : i32
    %c0_i32_0 = arith.constant 0 : i32
    %c0_i32_1 = arith.constant 0 : i32
    return %c0_i32, %c0_i32_0 : i32, i32
  }
  func.func @transform_7(%arg0: i32) -> (i32, i32) {
    %c0_i32 = arith.constant 0 : i32
    %c0_i32_0 = arith.constant 0 : i32
    return %arg0, %c0_i32 : i32, i32
  }
}

</mosaic_0001>

<llo_original>
// kernel: option_policy_forward.1
$region0: #{option_policy_forward.1}
  #allocation0 [shape = 'u32[]', space=smem, size = 0x4, offset = 0x4, fixed_abs, tag = 'smem constant byte address 0x4 - core index']
  #allocation1 [shape = 'u32[144,128]{1,0:T(1,128)}', space=vmem, size = 0x12000, scoped, tag = 'internal scratch']
  %s0 = inlined_call_operand.vmem [shape: bf16[8,8], index: 0, kind: input, shape index: {}]
  %s1 = inlined_call_operand.vmem [shape: bf16[8,64], index: 1, kind: input, shape index: {}]
  %s2 = inlined_call_operand.vmem [shape: f32[1,64], index: 2, kind: input, shape index: {}]
  %s3 = inlined_call_operand.vmem [shape: bf16[64,64], index: 3, kind: input, shape index: {}]
  %s4 = inlined_call_operand.vmem [shape: f32[1,64], index: 4, kind: input, shape index: {}]
  %s5 = inlined_call_operand.vmem [shape: bf16[64,128], index: 5, kind: input, shape index: {}]
  %s6 = inlined_call_operand.vmem [shape: f32[1,128], index: 6, kind: input, shape index: {}]
  %s7 = inlined_call_operand.vmem [shape: f32[8,4], index: 7, kind: output, shape index: {}]
  %s8 = sld [smem:[#allocation0]]
  $region38: #{option_policy_forward.1} parent=0
    _
  %s10 = ssub.s32 1, %s8
  %s11 = scalar_select 0, %s10, %s8
  // Predicated region
  $region2: #{option_policy_forward.1} parent=0 // pred_check
    _
  $region3: #{option_policy_forward.1} parent=0 // pred_check_branch
    %13 = sbr.rel (0) target = $region5
  $region4: #{option_policy_forward.1} parent=0 // pred_region
    _
  $region5: #{option_policy_forward.1} parent=0 // pred_fallthru
    _
  // Predicated region
  $region6: #{option_policy_forward.1} parent=0 // pred_check
    _
  $region7: #{option_policy_forward.1} parent=0 // pred_check_branch
    %15 = sbr.rel (0) target = $region9
  $region8: #{option_policy_forward.1} parent=0 // pred_region
    _
  $region9: #{option_policy_forward.1} parent=0 // pred_fallthru
    _
  // Predicated region
  $region10: #{option_policy_forward.1} parent=0 // pred_check
    _
  $region11: #{option_policy_forward.1} parent=0 // pred_check_branch
    %17 = sbr.rel (0) target = $region13
  $region12: #{option_policy_forward.1} parent=0 // pred_region
    _
  $region13: #{option_policy_forward.1} parent=0 // pred_fallthru
    _
  // Predicated region
  $region14: #{option_policy_forward.1} parent=0 // pred_check
    _
  $region15: #{option_policy_forward.1} parent=0 // pred_check_branch
    %19 = sbr.rel (0) target = $region17
  $region16: #{option_policy_forward.1} parent=0 // pred_region
    _
  $region17: #{option_policy_forward.1} parent=0 // pred_fallthru
    _
  // Predicated region
  $region18: #{option_policy_forward.1} parent=0 // pred_check
    _
  $region19: #{option_policy_forward.1} parent=0 // pred_check_branch
    %21 = sbr.rel (0) target = $region21
  $region20: #{option_policy_forward.1} parent=0 // pred_region
    _
  $region21: #{option_policy_forward.1} parent=0 // pred_fallthru
    _
  // Predicated region
  $region22: #{option_policy_forward.1} parent=0 // pred_check
    _
  $region23: #{option_policy_forward.1} parent=0 // pred_check_branch
    %23 = sbr.rel (0) target = $region25
  $region24: #{option_policy_forward.1} parent=0 // pred_region
    _
  $region25: #{option_policy_forward.1} parent=0 // pred_fallthru
    _
  // Predicated region
  $region26: #{option_policy_forward.1} parent=0 // pred_check
    _
  $region27: #{option_policy_forward.1} parent=0 // pred_check_branch
    %25 = sbr.rel (0) target = $region29
  $region28: #{option_policy_forward.1} parent=0 // pred_region
    _
  $region29: #{option_policy_forward.1} parent=0 // pred_fallthru
    _
  %v27 = vld [vmem:[%s0] sm:$0xf]
  %v28 = vld [vmem:[%s1] sm:$0xf]
  %v29 = vld [vmem:[%s2] sm:$0x1]
  %v31 = vlaneseq
  %v32 = vshrl.u32 %v31, 7
  %v33 = vsub.s32 0, %v32
  %v34 = vrot.slane %v29, %v33
  %vm36 = vcmask 64512
  %v38 = vsel %vm36, %v27, 0
  %vm40 = vcmask 1043456
  %v42 = vsel %vm40, %v28, 0
  %44 = vmatprep.subr.bf16.mxu0 0
  %45 = vmatpush1.bf16.msra.mxu0 %v42
  %46 = vmatprep.subr.bf16.mxu0 0
  %47 = vmatpush1.bf16.msra.mxu0 0
  %48 = vmatprep.subr.bf16.mxu0 0
  %49 = vmatpush1.bf16.msra.mxu0 0
  %50 = vmatprep.subr.bf16.mxu0 0
  %51 = vmatpush1.bf16.msra.mxu0 0
  %52 = vmatprep.subr.bf16.mxu0 0
  %53 = vmatpush1.bf16.msra.mxu0 0
  %54 = vmatprep.subr.bf16.mxu0 0
  %55 = vmatpush1.bf16.msra.mxu0 0
  %56 = vmatprep.subr.bf16.mxu0 0
  %57 = vmatpush1.bf16.msra.mxu0 0
  %58 = vmatprep.subr.bf16.mxu0 0
  %59 = vmatpush1.bf16.msra.mxu0 0
  %60 = vmatprep.subr.bf16.mxu0 0
  %61 = vmatpush1.bf16.msra.mxu0 0
  %62 = vmatprep.subr.bf16.mxu0 0
  %63 = vmatpush1.bf16.msra.mxu0 0
  %64 = vmatprep.subr.bf16.mxu0 0
  %65 = vmatpush1.bf16.msra.mxu0 0
  %66 = vmatprep.subr.bf16.mxu0 0
  %67 = vmatpush1.bf16.msra.mxu0 0
  %68 = vmatprep.subr.bf16.mxu0 0
  %69 = vmatpush1.bf16.msra.mxu0 0
  %70 = vmatprep.subr.bf16.mxu0 0
  %71 = vmatpush1.bf16.msra.mxu0 0
  %72 = vmatprep.subr.bf16.mxu0 0
  %73 = vmatpush1.bf16.msra.mxu0 0
  %74 = vmatprep.subr.bf16.mxu0 0
  %75 = vmatpush1.bf16.msra.mxu0 0
  %76 = vmatprep.mubr.bf16.mxu0 0
  %77 = vmatmul.mubr.bf16.gmra.mrb[0].mxu0 %v38
  %v78 = vpop.f32.mrb[0].mxu0
  %v79 = vadd.f32 %v34, %v78
  %v80 = vpop.f32.mrb[0].mxu0
  %v81 = vpop.f32.mrb[0].mxu0
  %v82 = vpop.f32.mrb[0].mxu0
  %83 = vdwg.mxu0
  %v84 = vmax.f32 %v79, 0.0
  %v85 = vpack.c.bf16 %v84, %v84
  %v86 = vld [vmem:[%s3] sm:$0xf]
  %v87 = vld [vmem:[%s3 + $0x4] sm:$0xf]
  %v88 = vld [vmem:[%s3 + $0x8] sm:$0xf]
  %v89 = vld [vmem:[%s3 + $0xc] sm:$0xf]
  %v90 = vld [vmem:[%s3 + $0x10] sm:$0xf]
  %v91 = vld [vmem:[%s3 + $0x14] sm:$0xf]
  %v92 = vld [vmem:[%s3 + $0x18] sm:$0xf]
  %v93 = vld [vmem:[%s3 + $0x1c] sm:$0xf]
  %v94 = vld [vmem:[%s4] sm:$0x1]
  %v96 = vlaneseq
  %v97 = vshrl.u32 %v96, 7
  %v98 = vsub.s32 0, %v97
  %v99 = vrot.slane %v94, %v98
  %v109 = vunpack.c.l.b16 %v86
  %v110 = vunpack.c.l.b16 %v87
  %v111 = vunpack.c.l.b16 %v88
  %v112 = vunpack.c.l.b16 %v89
  %v113 = vunpack.c.l.b16 %v90
  %v114 = vunpack.c.l.b16 %v91
  %v115 = vunpack.c.l.b16 %v92
  %v116 = vunpack.c.l.b16 %v93
  %v117 = vpack.c.b16 %v110, %v109
  %v118 = vpack.c.b16 %v112, %v111
  %v119 = vpack.c.b16 %v114, %v113
  %v120 = vpack.c.b16 %v116, %v115
  %vm125 = vcmask 523264
  %v127 = vsel %vm125, %v85, 0
  %129 = vmatprep.subr.bf16.mxu0 0
  %130 = vmatpush1.bf16.msra.mxu0 %v117
  %131 = vmatprep.subr.bf16.mxu0 0
  %132 = vmatpush1.bf16.msra.mxu0 %v118
  %133 = vmatprep.subr.bf16.mxu0 0
  %134 = vmatpush1.bf16.msra.mxu0 %v119
  %135 = vmatprep.subr.bf16.mxu0 0
  %136 = vmatpush1.bf16.msra.mxu0 %v120
  %137 = vmatprep.subr.bf16.mxu0 0
  %138 = vmatpush1.bf16.msra.mxu0 0
  %139 = vmatprep.subr.bf16.mxu0 0
  %140 = vmatpush1.bf16.msra.mxu0 0
  %141 = vmatprep.subr.bf16.mxu0 0
  %142 = vmatpush1.bf16.msra.mxu0 0
  %143 = vmatprep.subr.bf16.mxu0 0
  %144 = vmatpush1.bf16.msra.mxu0 0
  %145 = vmatprep.subr.bf16.mxu0 0
  %146 = vmatpush1.bf16.msra.mxu0 0
  %147 = vmatprep.subr.bf16.mxu0 0
  %148 = vmatpush1.bf16.msra.mxu0 0
  %149 = vmatprep.subr.bf16.mxu0 0
  %150 = vmatpush1.bf16.msra.mxu0 0
  %151 = vmatprep.subr.bf16.mxu0 0
  %152 = vmatpush1.bf16.msra.mxu0 0
  %153 = vmatprep.subr.bf16.mxu0 0
  %154 = vmatpush1.bf16.msra.mxu0 0
  %155 = vmatprep.subr.bf16.mxu0 0
  %156 = vmatpush1.bf16.msra.mxu0 0
  %157 = vmatprep.subr.bf16.mxu0 0
  %158 = vmatpush1.bf16.msra.mxu0 0
  %159 = vmatprep.subr.bf16.mxu0 0
  %160 = vmatpush1.bf16.msra.mxu0 0
  %161 = vmatprep.mubr.bf16.mxu0 0
  %162 = vmatmul.mubr.bf16.gmra.mrb[0].mxu0 %v127
  %v163 = vpop.f32.mrb[0].mxu0
  %v164 = vadd.f32 %v99, %v163
  %v165 = vpop.f32.mrb[0].mxu0
  %v166 = vpop.f32.mrb[0].mxu0
  %v167 = vpop.f32.mrb[0].mxu0
  %168 = vdwg.mxu0
  %v169 = vmax.f32 %v164, 0.0
  %v170 = vpack.c.bf16 %v169, %v169
  %v171 = vld [vmem:[%s5] sm:$0xf]
  %v172 = vld [vmem:[%s5 + $0x4] sm:$0xf]
  %v173 = vld [vmem:[%s5 + $0x8] sm:$0xf]
  %v174 = vld [vmem:[%s5 + $0xc] sm:$0xf]
  %v175 = vld [vmem:[%s5 + $0x10] sm:$0xf]
  %v176 = vld [vmem:[%s5 + $0x14] sm:$0xf]
  %v177 = vld [vmem:[%s5 + $0x18] sm:$0xf]
  %v178 = vld [vmem:[%s5 + $0x1c] sm:$0xf]
  %v179 = vld [vmem:[%s6] sm:$0x1]
  %v181 = vlaneseq
  %v182 = vshrl.u32 %v181, 7
  %v183 = vsub.s32 0, %v182
  %v184 = vrot.slane %v179, %v183
  %v194 = vunpack.c.l.b16 %v171
  %v195 = vunpack.c.l.b16 %v172
  %v196 = vunpack.c.l.b16 %v173
  %v197 = vunpack.c.l.b16 %v174
  %v198 = vunpack.c.l.b16 %v175
  %v199 = vunpack.c.l.b16 %v176
  %v200 = vunpack.c.l.b16 %v177
  %v201 = vunpack.c.l.b16 %v178
  %v202 = vpack.c.b16 %v195, %v194
  %v203 = vpack.c.b16 %v197, %v196
  %v204 = vpack.c.b16 %v199, %v198
  %v205 = vpack.c.b16 %v201, %v200
  %v211 = vsel %vm125, %v170, 0
  %213 = vmatprep.subr.bf16.mxu0 0
  %214 = vmatpush1.bf16.msra.mxu0 %v202
  %215 = vmatprep.subr.bf16.mxu0 0
  %216 = vmatpush1.bf16.msra.mxu0 %v203
  %217 = vmatprep.subr.bf16.mxu0 0
  %218 = vmatpush1.bf16.msra.mxu0 %v204
  %219 = vmatprep.subr.bf16.mxu0 0
  %220 = vmatpush1.bf16.msra.mxu0 %v205
  %221 = vmatprep.subr.bf16.mxu0 0
  %222 = vmatpush1.bf16.msra.mxu0 0
  %223 = vmatprep.subr.bf16.mxu0 0
  %224 = vmatpush1.bf16.msra.mxu0 0
  %225 = vmatprep.subr.bf16.mxu0 0
  %226 = vmatpush1.bf16.msra.mxu0 0
  %227 = vmatprep.subr.bf16.mxu0 0
  %228 = vmatpush1.bf16.msra.mxu0 0
  %229 = vmatprep.subr.bf16.mxu0 0
  %230 = vmatpush1.bf16.msra.mxu0 0
  %231 = vmatprep.subr.bf16.mxu0 0
  %232 = vmatpush1.bf16.msra.mxu0 0
  %233 = vmatprep.subr.bf16.mxu0 0
  %234 = vmatpush1.bf16.msra.mxu0 0
  %235 = vmatprep.subr.bf16.mxu0 0
  %236 = vmatpush1.bf16.msra.mxu0 0
  %237 = vmatprep.subr.bf16.mxu0 0
  %238 = vmatpush1.bf16.msra.mxu0 0
  %239 = vmatprep.subr.bf16.mxu0 0
  %240 = vmatpush1.bf16.msra.mxu0 0
  %241 = vmatprep.subr.bf16.mxu0 0
  %242 = vmatpush1.bf16.msra.mxu0 0
  %243 = vmatprep.subr.bf16.mxu0 0
  %244 = vmatpush1.bf16.msra.mxu0 0
  %245 = vmatprep.mubr.bf16.mxu0 0
  %246 = vmatmul.mubr.bf16.gmra.mrb[0].mxu0 %v211
  %v247 = vpop.f32.mrb[0].mxu0
  %v248 = vadd.f32 %v184, %v247
  %v249 = vpop.f32.mrb[0].mxu0
  %v250 = vpop.f32.mrb[0].mxu0
  %v251 = vpop.f32.mrb[0].mxu0
  %252 = vdwg.mxu0
  %253 = vmax.xlane.f32.xlu0 %v248
  %v254 = vpop.xlane.xlu0 %253
  %v255 = vsub.f32 %v248, %v254
  %v256 = vmul.f32 %v255, 1.442695
  %v257 = vpow.pop %v256
  %258 = vadd.xlane.f32.xlu0 %v257
  %v259 = vpop.xlane.xlu0 %258
  %v260 = vrcp.pop %v259
  %v261 = vmul.f32 %v257, %v260
  %vm262 = vcmask 31744
  %263 = vst.msk [vmem:[%s7] sm:$0xff] %vm262, %v261
  // Predicated region
  $region30: #{option_policy_forward.1} parent=0 // pred_check
    _
  $region31: #{option_policy_forward.1} parent=0 // pred_check_branch
    %265 = sbr.rel (0) target = $region33
  $region32: #{option_policy_forward.1} parent=0 // pred_region
    _
  $region33: #{option_policy_forward.1} parent=0 // pred_fallthru
    _
  // Predicated region
  $region34: #{option_policy_forward.1} parent=0 // pred_check
    _
  $region35: #{option_policy_forward.1} parent=0 // pred_check_branch
    %267 = sbr.rel (0) target = $region37
  $region36: #{option_policy_forward.1} parent=0 // pred_region
    _
  $region37: #{option_policy_forward.1} parent=0 // pred_fallthru
    _

</llo_original>
